<compile_context>
chip_gen: v7x
topology: tpu7x:2x2x1
jax: 0.10.0
libtpu: 0.0.40
codegen_flags: <defaults>
</compile_context>

<pallas_src>
import functools

import jax
import jax.numpy as jnp
from jax.experimental import pallas as pl
from jax.experimental.pallas import tpu as pltpu


def _round_up(n, m):
    return ((n + m - 1) // m) * m


def _choose_tile(B, tile_b, max_tile, min_grid_steps=8):
    """Pick the lane (batch) tile.  Either full-extent (== B, no alignment
    constraint) or a multiple of 128 (lane-aligned), per the (8,128) rule."""
    if tile_b is not None:
        if tile_b >= B:
            return B                       # single full-extent block
        return max(128, _round_up(tile_b, 128))
    if B <= 1024:
        return B                           # tiny batch: one block, no padding
    tb = _round_up(pl.cdiv(B, min_grid_steps), 128)
    return max(128, min(max_tile, tb))


def _a2c_kernel(x_ref, w1_ref, b1_ref, wf_ref, bf_ref, wv2_ref, bv2_ref,
                out_ref, *, num_actions, pi_rows):
    # x: (input_dim, tb) -- batch on lanes.  Compute in f32.
    x = x_ref[...].astype(jnp.float32)

    # fc: relu(W1 @ x + b1) -> (hidden, tb)
    h = jnp.maximum(
        jnp.dot(w1_ref[...], x, preferred_element_type=jnp.float32) + b1_ref[...],
        0.0)

    # Fused policy head + value-head layer 1 (single MXU matmul):
    #   rows [0, num_actions)        -> pi pre-activation
    #   rows [pi_rows, pi_rows+hid)  -> value hidden pre-activation (ReLU)
    # pi block is zero-padded to pi_rows (=8) so the split is sublane-aligned.
    z = jnp.dot(wf_ref[...], h, preferred_element_type=jnp.float32) + bf_ref[...]
    hv = jnp.maximum(z[pi_rows:, :], 0.0)          # (hidden, tb)

    # Value layer 2 (out width 1): broadcast-mul + sublane reduction (VPU/XLU).
    v = jnp.sum(hv * wv2_ref[...], axis=0, keepdims=True) + bv2_ref[...]  # (1, tb)

    # Write directly into output sub-views (no concatenate).
    out_ref[:num_actions, :] = z[:num_actions, :].astype(out_ref.dtype)
    out_ref[num_actions:, :] = v.astype(out_ref.dtype)


def a2c_forward_slab(xT, params, *, tile_b=None, max_tile=8192,
                     out_dtype=jnp.float32):
    """Performance API.  xT: (input_dim, B) float32/bf16.
    Returns slab (num_actions+1, B): rows [pi | v], dtype out_dtype."""
    input_dim, B = xT.shape
    hidden = params["w1"].shape[1]
    num_actions = params["wpi"].shape[1]
    out_dim = num_actions + 1
    pi_rows = max(8, _round_up(num_actions, 8))     # sublane-aligned pi block

    # Tiny [out, in]-layout weights (transposes are free):
    w1_t = params["w1"].T.astype(jnp.float32)                       # (hidden, input_dim)
    b1_c = params["b1"].T.astype(jnp.float32)                       # (hidden, 1)
    wpi_pad = jnp.zeros((pi_rows, hidden), jnp.float32).at[:num_actions].set(
        params["wpi"].T)
    bpi_pad = jnp.zeros((pi_rows, 1), jnp.float32).at[:num_actions].set(
        params["bpi"].T)
    wf_t = jnp.concatenate([wpi_pad, params["wv1"].T.astype(jnp.float32)], axis=0)
    bf_c = jnp.concatenate([bpi_pad, params["bv1"].T.astype(jnp.float32)], axis=0)
    wv2_c = params["wv2"].astype(jnp.float32)                       # (hidden, 1)
    bv2 = params["bv2"].astype(jnp.float32)                         # (1, 1)

    tb = _choose_tile(B, tile_b, max_tile)
    grid = (pl.cdiv(B, tb),)       # partial last tile handled by edge masking

    def batch_map(i):
        return (0, i)

    def resident_map(i):
        return (0, 0)              # weights/biases stay VMEM-resident

    flops = 2 * B * (input_dim * hidden + hidden * (pi_rows + hidden) + hidden)
    bytes_accessed = (
        B * input_dim * xT.dtype.itemsize
        + B * out_dim * jnp.dtype(out_dtype).itemsize
        + (input_dim * hidden + hidden
           + hidden * (pi_rows + hidden) + (pi_rows + hidden)
           + hidden + 1) * 4)

    out = pl.pallas_call(
        functools.partial(_a2c_kernel, num_actions=num_actions, pi_rows=pi_rows),
        out_shape=jax.ShapeDtypeStruct((out_dim, B), out_dtype),
        grid_spec=pltpu.PrefetchScalarGridSpec(
            num_scalar_prefetch=0,
            grid=grid,
            in_specs=[
                pl.BlockSpec((input_dim, tb), batch_map),
                pl.BlockSpec(w1_t.shape, resident_map),
                pl.BlockSpec(b1_c.shape, resident_map),
                pl.BlockSpec(wf_t.shape, resident_map),
                pl.BlockSpec(bf_c.shape, resident_map),
                pl.BlockSpec(wv2_c.shape, resident_map),
                pl.BlockSpec(bv2.shape, resident_map),
            ],
            out_specs=pl.BlockSpec((out_dim, tb), batch_map),
        ),
        compiler_params=pltpu.CompilerParams(
            dimension_semantics=("parallel",),
            vmem_limit_bytes=32 << 20,
        ),
        cost_estimate=pl.CostEstimate(
            flops=flops, transcendentals=0, bytes_accessed=bytes_accessed),
    )(xT, w1_t, b1_c, wf_t, bf_c, wv2_c, bv2)
    return out


def a2c_forward(x, params, *, tile_b=None, max_tile=8192, out_dtype=jnp.float32):
    """PyTorch-compatible interface.  x: (B, input_dim).  Returns (pi, v).
    Throughput-sensitive callers should use a2c_forward_slab directly (avoids
    the wrapper transposes / slices, which are extra XLA passes over x/out)."""
    num_actions = params["wpi"].shape[1]
    slab = a2c_forward_slab(x.T, params, tile_b=tile_b, max_tile=max_tile,
                            out_dtype=out_dtype)
    return slab[:num_actions, :].T, slab[num_actions:, :].T


def init_params(key, input_dim=7, hidden_dim=16, num_actions=3):
    """Mimics PyTorch default Linear init (uniform +-1/sqrt(fan_in)).
    Weights stored as [in, out] (transposed relative to PyTorch)."""
    keys = jax.random.split(key, 8)

    def lin(kw, kb, fan_in, fan_out):
        bound = 1.0 / jnp.sqrt(jnp.float32(fan_in))
        w = jax.random.uniform(kw, (fan_in, fan_out), jnp.float32, -bound, bound)
        b = jax.random.uniform(kb, (1, fan_out), jnp.float32, -bound, bound)
        return w, b

    w1, b1 = lin(keys[0], keys[1], input_dim, hidden_dim)
    wpi, bpi = lin(keys[2], keys[3], hidden_dim, num_actions)
    wv1, bv1 = lin(keys[4], keys[5], hidden_dim, hidden_dim)
    wv2, bv2 = lin(keys[6], keys[7], hidden_dim, 1)
    return {
        "w1": w1, "b1": b1,
        "wpi": wpi, "bpi": bpi,
        "wv1": wv1, "bv1": bv1,
        "wv2": wv2, "bv2": bv2,
    }


def a2c_forward_ref(x, p):
    """Plain-JAX reference for correctness check."""
    h = jnp.maximum(x @ p["w1"] + p["b1"], 0.0)
    pi = h @ p["wpi"] + p["bpi"]
    hv = jnp.maximum(h @ p["wv1"] + p["bv1"], 0.0)
    v = hv @ p["wv2"] + p["bv2"]
    return pi, v


if __name__ == "__main__":
    key = jax.random.PRNGKey(0)
    k_x1, k_x2, k_p = jax.random.split(key, 3)

    INPUT_DIM, HIDDEN_DIM, NUM_ACTIONS = 7, 16, 3
    params = init_params(k_p, INPUT_DIM, HIDDEN_DIM, NUM_ACTIONS)

    # Case 1: multi-step lane grid with a partial (masked) last tile
    #         (B=300, tb=128 -> grid=(3,)); weights stay VMEM-resident.
    B1 = 300
    x1 = jax.random.normal(k_x1, (B1, INPUT_DIM), jnp.float32)
    pi1, v1 = a2c_forward(x1, params, tile_b=128)
    jax.block_until_ready((pi1, v1))
    pi1_ref, v1_ref = a2c_forward_ref(x1, params)
    assert pi1.shape == (B1, NUM_ACTIONS) and v1.shape == (B1, 1)
    assert jnp.allclose(pi1, pi1_ref, atol=1e-5, rtol=1e-5)
    assert jnp.allclose(v1, v1_ref, atol=1e-5, rtol=1e-5)

    # Case 2: tiny batch -> single full-extent lane block, no padding anywhere.
    B2 = 5
    x2 = jax.random.normal(k_x2, (B2, INPUT_DIM), jnp.float32)
    pi2, v2 = a2c_forward(x2, params)
    jax.block_until_ready((pi2, v2))
    pi2_ref, v2_ref = a2c_forward_ref(x2, params)
    assert pi2.shape == (B2, NUM_ACTIONS) and v2.shape == (B2, 1)
    assert jnp.allclose(pi2, pi2_ref, atol=1e-5, rtol=1e-5)
    assert jnp.allclose(v2, v2_ref, atol=1e-5, rtol=1e-5)

    print("KERNEL_OK")
</pallas_src>

<mosaic_0001>
module attributes {stable_mosaic.version = 11 : i64} {
  func.func @_a2c_kernel(%arg0: i32, %arg1: memref<7x128xf32, #tpu.memory_space<vmem>>, %arg2: memref<16x7xf32, #tpu.memory_space<vmem>>, %arg3: memref<16x1xf32, #tpu.memory_space<vmem>>, %arg4: memref<24x16xf32, #tpu.memory_space<vmem>>, %arg5: memref<24x1xf32, #tpu.memory_space<vmem>>, %arg6: memref<16x1xf32, #tpu.memory_space<vmem>>, %arg7: memref<1x1xf32, #tpu.memory_space<vmem>>, %arg8: memref<4x128xf32, #tpu.memory_space<vmem>>) attributes {dimension_semantics = [#tpu.dimension_semantics<parallel>], iteration_bounds = array<i64: 3>, scalar_prefetch = 0 : i64, scratch_operands = 0 : i64, tpu.core_type = #tpu.core_type<tc>, window_params = [{transform_indices = @transform_0, window_bounds = array<i64: 7, 128>}, {pipeline_mode = #tpu.pipeline_mode<synchronous>, transform_indices = @transform_1, window_bounds = array<i64: 16, 7>}, {pipeline_mode = #tpu.pipeline_mode<synchronous>, transform_indices = @transform_2, window_bounds = array<i64: 16, 1>}, {pipeline_mode = #tpu.pipeline_mode<synchronous>, transform_indices = @transform_3, window_bounds = array<i64: 24, 16>}, {pipeline_mode = #tpu.pipeline_mode<synchronous>, transform_indices = @transform_4, window_bounds = array<i64: 24, 1>}, {pipeline_mode = #tpu.pipeline_mode<synchronous>, transform_indices = @transform_5, window_bounds = array<i64: 16, 1>}, {pipeline_mode = #tpu.pipeline_mode<synchronous>, transform_indices = @transform_6, window_bounds = array<i64: 1, 1>}, {transform_indices = @transform_7, window_bounds = array<i64: 4, 128>}]} {
    %c0 = arith.constant 0 : index
    %c0_0 = arith.constant 0 : index
    %0 = vector.load %arg1[%c0, %c0_0] : memref<7x128xf32, #tpu.memory_space<vmem>>, vector<7x128xf32>
    %c0_1 = arith.constant 0 : index
    %c0_2 = arith.constant 0 : index
    %1 = vector.load %arg2[%c0_1, %c0_2] : memref<16x7xf32, #tpu.memory_space<vmem>>, vector<16x7xf32>
    %cst = arith.constant dense<0.000000e+00> : vector<16x128xf32>
    %2 = tpu.matmul %1, %0, %cst {dimension_numbers = #tpu.dot_dimension_numbers<[1], [0], [0], [1], [0, 0, 1, 1], [], []>} : vector<16x7xf32>, vector<7x128xf32>, vector<16x128xf32> -> vector<16x128xf32>
    %c0_3 = arith.constant 0 : index
    %c0_4 = arith.constant 0 : index
    %3 = vector.load %arg3[%c0_3, %c0_4] : memref<16x1xf32, #tpu.memory_space<vmem>>, vector<16x1xf32>
    %4 = vector.broadcast %3 : vector<16x1xf32> to vector<16x128xf32>
    %5 = arith.addf %2, %4 : vector<16x128xf32>
    %cst_5 = arith.constant 0.000000e+00 : f32
    %6 = vector.broadcast %cst_5 : f32 to vector<16x128xf32>
    %7 = arith.maximumf %5, %6 : vector<16x128xf32>
    %c0_6 = arith.constant 0 : index
    %c0_7 = arith.constant 0 : index
    %8 = vector.load %arg4[%c0_6, %c0_7] : memref<24x16xf32, #tpu.memory_space<vmem>>, vector<24x16xf32>
    %cst_8 = arith.constant dense<0.000000e+00> : vector<24x128xf32>
    %9 = tpu.matmul %8, %7, %cst_8 {dimension_numbers = #tpu.dot_dimension_numbers<[1], [0], [0], [1], [0, 0, 1, 1], [], []>} : vector<24x16xf32>, vector<16x128xf32>, vector<24x128xf32> -> vector<24x128xf32>
    %c0_9 = arith.constant 0 : index
    %c0_10 = arith.constant 0 : index
    %10 = vector.load %arg5[%c0_9, %c0_10] : memref<24x1xf32, #tpu.memory_space<vmem>>, vector<24x1xf32>
    %11 = vector.broadcast %10 : vector<24x1xf32> to vector<24x128xf32>
    %12 = arith.addf %9, %11 : vector<24x128xf32>
    %13 = vector.extract_strided_slice %12 {offsets = [8, 0], sizes = [16, 128], strides = [1, 1]} : vector<24x128xf32> to vector<16x128xf32>
    %cst_11 = arith.constant 0.000000e+00 : f32
    %14 = vector.broadcast %cst_11 : f32 to vector<16x128xf32>
    %15 = arith.maximumf %13, %14 : vector<16x128xf32>
    %c0_12 = arith.constant 0 : index
    %c0_13 = arith.constant 0 : index
    %16 = vector.load %arg6[%c0_12, %c0_13] : memref<16x1xf32, #tpu.memory_space<vmem>>, vector<16x1xf32>
    %17 = vector.broadcast %16 : vector<16x1xf32> to vector<16x128xf32>
    %18 = arith.mulf %15, %17 : vector<16x128xf32>
    %cst_14 = arith.constant dense<0.000000e+00> : vector<128xf32>
    %19 = vector.multi_reduction <add>, %18, %cst_14 [0] : vector<16x128xf32> to vector<128xf32>
    %20 = vector.shape_cast %19 : vector<128xf32> to vector<1x128xf32>
    %c0_15 = arith.constant 0 : index
    %c0_16 = arith.constant 0 : index
    %21 = vector.load %arg7[%c0_15, %c0_16] : memref<1x1xf32, #tpu.memory_space<vmem>>, vector<1x1xf32>
    %22 = vector.broadcast %21 : vector<1x1xf32> to vector<1x128xf32>
    %23 = arith.addf %20, %22 : vector<1x128xf32>
    %24 = vector.extract_strided_slice %12 {offsets = [0, 0], sizes = [3, 128], strides = [1, 1]} : vector<24x128xf32> to vector<3x128xf32>
    %c0_17 = arith.constant 0 : index
    %c0_18 = arith.constant 0 : index
    %25 = vector.load %arg8[%c0_17, %c0_18] : memref<4x128xf32, #tpu.memory_space<vmem>>, vector<3x128xf32>
    tpu.vector_store %arg8[%c0_17, %c0_18], %24 {strides = array<i32>} : memref<4x128xf32, #tpu.memory_space<vmem>>, vector<3x128xf32>,
    %c3 = arith.constant 3 : index
    %c0_19 = arith.constant 0 : index
    %26 = vector.load %arg8[%c3, %c0_19] : memref<4x128xf32, #tpu.memory_space<vmem>>, vector<1x128xf32>
    tpu.vector_store %arg8[%c3, %c0_19], %23 {strides = array<i32>} : memref<4x128xf32, #tpu.memory_space<vmem>>, vector<1x128xf32>,
    return
  }
  func.func @transform_0(%arg0: i32) -> (i32, i32) {
    %c0_i32 = arith.constant 0 : i32
    %c0_i32_0 = arith.constant 0 : i32
    return %c0_i32, %arg0 : i32, i32
  }
  func.func @transform_1(%arg0: i32) -> (i32, i32) {
    %c0_i32 = arith.constant 0 : i32
    %c0_i32_0 = arith.constant 0 : i32
    %c0_i32_1 = arith.constant 0 : i32
    return %c0_i32, %c0_i32_0 : i32, i32
  }
  func.func @transform_2(%arg0: i32) -> (i32, i32) {
    %c0_i32 = arith.constant 0 : i32
    %c0_i32_0 = arith.constant 0 : i32
    %c0_i32_1 = arith.constant 0 : i32
    return %c0_i32, %c0_i32_0 : i32, i32
  }
  func.func @transform_3(%arg0: i32) -> (i32, i32) {
    %c0_i32 = arith.constant 0 : i32
    %c0_i32_0 = arith.constant 0 : i32
    %c0_i32_1 = arith.constant 0 : i32
    return %c0_i32, %c0_i32_0 : i32, i32
  }
  func.func @transform_4(%arg0: i32) -> (i32, i32) {
    %c0_i32 = arith.constant 0 : i32
    %c0_i32_0 = arith.constant 0 : i32
    %c0_i32_1 = arith.constant 0 : i32
    return %c0_i32, %c0_i32_0 : i32, i32
  }
  func.func @transform_5(%arg0: i32) -> (i32, i32) {
    %c0_i32 = arith.constant 0 : i32
    %c0_i32_0 = arith.constant 0 : i32
    %c0_i32_1 = arith.constant 0 : i32
    return %c0_i32, %c0_i32_0 : i32, i32
  }
  func.func @transform_6(%arg0: i32) -> (i32, i32) {
    %c0_i32 = arith.constant 0 : i32
    %c0_i32_0 = arith.constant 0 : i32
    %c0_i32_1 = arith.constant 0 : i32
    return %c0_i32, %c0_i32_0 : i32, i32
  }
  func.func @transform_7(%arg0: i32) -> (i32, i32) {
    %c0_i32 = arith.constant 0 : i32
    %c0_i32_0 = arith.constant 0 : i32
    return %c0_i32, %arg0 : i32, i32
  }
}

</mosaic_0001>

<llo_original>
// kernel: tpu_custom_call.1
$region0: #{tpu_custom_call.1}
  #allocation0 [shape = 'u32[]', space=smem, size = 0x4, offset = 0x4, fixed_abs, tag = 'smem constant byte address 0x4 - core index']
  #allocation1 [shape = 'u32[144,128]{1,0:T(1,128)}', space=vmem, size = 0x12000, scoped, tag = 'internal scratch']
  #allocation2 [shape = 'f32[1,1]{1,0:T(1,128)S(1)}', space=vmem, size = 0x200, scoped, tag = 'scoped memory for tpu_custom_call.1']
  %s0 = inlined_call_operand.vmem [shape: f32[7,300], index: 0, kind: input, shape index: {}]
  %s1 = inlined_call_operand.vmem [shape: f32[16,7], index: 1, kind: input, shape index: {}]
  %s2 = inlined_call_operand.vmem [shape: f32[16,1], index: 2, kind: input, shape index: {}]
  %s3 = inlined_call_operand.vmem [shape: f32[24,16], index: 3, kind: input, shape index: {}]
  %s4 = inlined_call_operand.vmem [shape: f32[24,1], index: 4, kind: input, shape index: {}]
  %s5 = inlined_call_operand.vmem [shape: f32[16,1], index: 5, kind: input, shape index: {}]
  %s6 = inlined_call_operand.<no memory space> [shape: f32[1,1], index: 6, kind: input, shape index: {}]
  %s7 = inlined_call_operand.hbm [shape: f32[4,300], index: 7, kind: output, shape index: {}]
  %s8 = sld [smem:[#allocation0]]
  $region61: #{tpu_custom_call.1} parent=0
    _
  %s10 = ssub.s32 1, %s8
  %s11 = scalar_select 0, %s10, %s8
  %v12 = vstv %s6
  %13 = vst [vmem:[#allocation2] sm:$0x1] %v12
  $region1: #{tpu_custom_call.1} parent=0
    #allocation3 [shape = 'u8[4096]{0}', space=vmem, size = 0x1000, scoped, tag = 'output window, operand 0']
    #allocation4 [shape = 's32[2]{0}', space=sflag, size = 0x8, scoped, tag = 'scoped memory for tpu_custom_call.1']
    %14 = vsyncpa [#allocation4], 0
    %s15 = scalar_lea.sflag [#allocation4], 1
    %16 = vsyncpa %s15, 0
    loop: start=0, step=1, limit=5
    $region2: #{tpu_custom_call.1} parent=1 // loop_pre_header
      _
    $region3: #{tpu_custom_call.1} parent=1 // loop_header
      %s18 = sphi 0, %s22
      %p19 = scmp.ge.s32.totalorder %s18, 5
      %s28 = sphi 0, %s30
      %s31 = sphi 0, %s28
      %s32 = sphi 0, %s31
      %s48 = sphi 0, %s32
      %s52 = sphi 0, %s52
      %s54 = sphi 0, %s52
      %s55 = sphi 0, %s54
      %s69 = sphi 0, %s55
      %s73 = sphi 0, %s73
      %s75 = sphi 0, %s73
      %s76 = sphi 0, %s75
      %s90 = sphi 0, %s76
      %s94 = sphi 0, %s94
      %s96 = sphi 0, %s94
      %s97 = sphi 0, %s96
      %s111 = sphi 0, %s97
      %s115 = sphi 0, %s115
      %s117 = sphi 0, %s115
      %s118 = sphi 0, %s117
      %s132 = sphi 0, %s118
      %s136 = sphi 0, %s136
      %s138 = sphi 0, %s136
      %s139 = sphi 0, %s138
      %s153 = sphi 0, %s139
      %s157 = sphi 0, %s157
      %s159 = sphi 0, %s157
      %s160 = sphi 0, %s159
      %s174 = sphi 0, %s160
      %s180 = sphi 0, %s182
      %s183 = sphi 0, %s180
      %s184 = sphi 0, %s183
      %s200 = sphi 0, %s184
    $region4: #{tpu_custom_call.1} parent=1 // loop_header_branch
      %21 = sbr.rel (%p19) target = $region8
    $region5: #{tpu_custom_call.1} parent=1 // loop_body
      %s23 = ssub.s32 %s18, 1
      %s24 = ssub.s32 %s18, 2
      %s25 = sadd.s32 %s18, 1
      %s26 = ssub.s32 %s18, %s25
      %p27 = scmp.eq.s32.totalorder %s26, 0
      %s29 = sadd.s32 %s28, 1
      %s30 = scalar_select %p27, %s28, %s29
      %p33 = pneg %p27
      %p34 = scmp.eq.s32.totalorder %s18, 2
      %p35 = por %p33, %p34
      %p36 = scmp.ne.s32.totalorder %s28, %s31
      %p37 = scmp.eq.s32.totalorder %s18, 0
      %p38 = por %p36, %p37
      %p39 = scmp.ne.s32.totalorder %s28, %s31
      %p40 = scmp.eq.s32.totalorder %s23, 2
      %p41 = por %p39, %p40
      %p42 = scmp.ne.s32.totalorder %s31, %s32
      %p43 = scmp.eq.s32.totalorder %s23, 0
      %p44 = por %p42, %p43
      %p45 = scmp.ne.s32.totalorder %s31, %s32
      %p46 = scmp.eq.s32.totalorder %s24, 2
      %p47 = por %p45, %p46
      %p49 = scmp.ne.s32.totalorder %s32, %s48
      %p50 = scmp.eq.s32.totalorder %s24, 0
      %p51 = por %p49, %p50
      %s53 = sadd.s32 %s52, 1
      %p56 = scmp.eq.s32.totalorder %s18, 2
      %p57 = scmp.ne.s32.totalorder %s52, %s54
      %p58 = scmp.eq.s32.totalorder %s18, 0
      %p59 = por %p57, %p58
      %p60 = scmp.ne.s32.totalorder %s52, %s54
      %p61 = scmp.eq.s32.totalorder %s23, 2
      %p62 = por %p60, %p61
      %p63 = scmp.ne.s32.totalorder %s54, %s55
      %p64 = scmp.eq.s32.totalorder %s23, 0
      %p65 = por %p63, %p64
      %p66 = scmp.ne.s32.totalorder %s54, %s55
      %p67 = scmp.eq.s32.totalorder %s24, 2
      %p68 = por %p66, %p67
      %p70 = scmp.ne.s32.totalorder %s55, %s69
      %p71 = scmp.eq.s32.totalorder %s24, 0
      %p72 = por %p70, %p71
      %s74 = sadd.s32 %s73, 1
      %p77 = scmp.eq.s32.totalorder %s18, 2
      %p78 = scmp.ne.s32.totalorder %s73, %s75
      %p79 = scmp.eq.s32.totalorder %s18, 0
      %p80 = por %p78, %p79
      %p81 = scmp.ne.s32.totalorder %s73, %s75
      %p82 = scmp.eq.s32.totalorder %s23, 2
      %p83 = por %p81, %p82
      %p84 = scmp.ne.s32.totalorder %s75, %s76
      %p85 = scmp.eq.s32.totalorder %s23, 0
      %p86 = por %p84, %p85
      %p87 = scmp.ne.s32.totalorder %s75, %s76
      %p88 = scmp.eq.s32.totalorder %s24, 2
      %p89 = por %p87, %p88
      %p91 = scmp.ne.s32.totalorder %s76, %s90
      %p92 = scmp.eq.s32.totalorder %s24, 0
      %p93 = por %p91, %p92
      %s95 = sadd.s32 %s94, 1
      %p98 = scmp.eq.s32.totalorder %s18, 2
      %p99 = scmp.ne.s32.totalorder %s94, %s96
      %p100 = scmp.eq.s32.totalorder %s18, 0
      %p101 = por %p99, %p100
      %p102 = scmp.ne.s32.totalorder %s94, %s96
      %p103 = scmp.eq.s32.totalorder %s23, 2
      %p104 = por %p102, %p103
      %p105 = scmp.ne.s32.totalorder %s96, %s97
      %p106 = scmp.eq.s32.totalorder %s23, 0
      %p107 = por %p105, %p106
      %p108 = scmp.ne.s32.totalorder %s96, %s97
      %p109 = scmp.eq.s32.totalorder %s24, 2
      %p110 = por %p108, %p109
      %p112 = scmp.ne.s32.totalorder %s97, %s111
      %p113 = scmp.eq.s32.totalorder %s24, 0
      %p114 = por %p112, %p113
      %s116 = sadd.s32 %s115, 1
      %p119 = scmp.eq.s32.totalorder %s18, 2
      %p120 = scmp.ne.s32.totalorder %s115, %s117
      %p121 = scmp.eq.s32.totalorder %s18, 0
      %p122 = por %p120, %p121
      %p123 = scmp.ne.s32.totalorder %s115, %s117
      %p124 = scmp.eq.s32.totalorder %s23, 2
      %p125 = por %p123, %p124
      %p126 = scmp.ne.s32.totalorder %s117, %s118
      %p127 = scmp.eq.s32.totalorder %s23, 0
      %p128 = por %p126, %p127
      %p129 = scmp.ne.s32.totalorder %s117, %s118
      %p130 = scmp.eq.s32.totalorder %s24, 2
      %p131 = por %p129, %p130
      %p133 = scmp.ne.s32.totalorder %s118, %s132
      %p134 = scmp.eq.s32.totalorder %s24, 0
      %p135 = por %p133, %p134
      %s137 = sadd.s32 %s136, 1
      %p140 = scmp.eq.s32.totalorder %s18, 2
      %p141 = scmp.ne.s32.totalorder %s136, %s138
      %p142 = scmp.eq.s32.totalorder %s18, 0
      %p143 = por %p141, %p142
      %p144 = scmp.ne.s32.totalorder %s136, %s138
      %p145 = scmp.eq.s32.totalorder %s23, 2
      %p146 = por %p144, %p145
      %p147 = scmp.ne.s32.totalorder %s138, %s139
      %p148 = scmp.eq.s32.totalorder %s23, 0
      %p149 = por %p147, %p148
      %p150 = scmp.ne.s32.totalorder %s138, %s139
      %p151 = scmp.eq.s32.totalorder %s24, 2
      %p152 = por %p150, %p151
      %p154 = scmp.ne.s32.totalorder %s139, %s153
      %p155 = scmp.eq.s32.totalorder %s24, 0
      %p156 = por %p154, %p155
      %s158 = sadd.s32 %s157, 1
      %p161 = scmp.eq.s32.totalorder %s18, 2
      %p162 = scmp.ne.s32.totalorder %s157, %s159
      %p163 = scmp.eq.s32.totalorder %s18, 0
      %p164 = por %p162, %p163
      %p165 = scmp.ne.s32.totalorder %s157, %s159
      %p166 = scmp.eq.s32.totalorder %s23, 2
      %p167 = por %p165, %p166
      %p168 = scmp.ne.s32.totalorder %s159, %s160
      %p169 = scmp.eq.s32.totalorder %s23, 0
      %p170 = por %p168, %p169
      %p171 = scmp.ne.s32.totalorder %s159, %s160
      %p172 = scmp.eq.s32.totalorder %s24, 2
      %p173 = por %p171, %p172
      %p175 = scmp.ne.s32.totalorder %s160, %s174
      %p176 = scmp.eq.s32.totalorder %s24, 0
      %p177 = por %p175, %p176
      %s178 = ssub.s32 %s18, %s25
      %p179 = scmp.eq.s32.totalorder %s178, 0
      %s181 = sadd.s32 %s180, 1
      %s182 = scalar_select %p179, %s180, %s181
      %p185 = pneg %p179
      %p186 = scmp.eq.s32.totalorder %s18, 2
      %p187 = por %p185, %p186
      %p188 = scmp.ne.s32.totalorder %s180, %s183
      %p189 = scmp.eq.s32.totalorder %s18, 0
      %p190 = por %p188, %p189
      %p191 = scmp.ne.s32.totalorder %s180, %s183
      %p192 = scmp.eq.s32.totalorder %s23, 2
      %p193 = por %p191, %p192
      %p194 = scmp.ne.s32.totalorder %s183, %s184
      %p195 = scmp.eq.s32.totalorder %s23, 0
      %p196 = por %p194, %p195
      %p197 = scmp.ne.s32.totalorder %s183, %s184
      %p198 = scmp.eq.s32.totalorder %s24, 2
      %p199 = por %p197, %p198
      %p201 = scmp.ne.s32.totalorder %s184, %s200
      %p202 = scmp.eq.s32.totalorder %s24, 0
      %p203 = por %p201, %p202
      %p204 = scmp.le.s32.totalorder 1, %s18
      %p205 = scmp.lt.s32.totalorder %s18, 4
      %p206 = pnand %p204, %p205
      %p207 = pneg %p206
      // Predicated region
      $region9: #{tpu_custom_call.1} parent=5 // pred_check
        _
      $region10: #{tpu_custom_call.1} parent=5 // pred_check_branch
        %209 = sbr.rel (%p206) target = $region12
      $region11: #{tpu_custom_call.1} parent=5 // pred_region
        %s210 = ssub.s32 %s18, 1
        // Predicated region
        $region13: #{tpu_custom_call.1} parent=11 // pred_check
          %p211 = pneg %p65
        $region14: #{tpu_custom_call.1} parent=11 // pred_check_branch
          %213 = sbr.rel (%p211) target = $region16
        $region15: #{tpu_custom_call.1} parent=11 // pred_region
          _
        $region16: #{tpu_custom_call.1} parent=11 // pred_fallthru
          _
        // Predicated region
        $region17: #{tpu_custom_call.1} parent=11 // pred_check
          %p214 = pneg %p86
        $region18: #{tpu_custom_call.1} parent=11 // pred_check_branch
          %216 = sbr.rel (%p214) target = $region20
        $region19: #{tpu_custom_call.1} parent=11 // pred_region
          _
        $region20: #{tpu_custom_call.1} parent=11 // pred_fallthru
          _
        // Predicated region
        $region21: #{tpu_custom_call.1} parent=11 // pred_check
          %p217 = pneg %p107
        $region22: #{tpu_custom_call.1} parent=11 // pred_check_branch
          %219 = sbr.rel (%p217) target = $region24
        $region23: #{tpu_custom_call.1} parent=11 // pred_region
          _
        $region24: #{tpu_custom_call.1} parent=11 // pred_fallthru
          _
        // Predicated region
        $region25: #{tpu_custom_call.1} parent=11 // pred_check
          %p220 = pneg %p128
        $region26: #{tpu_custom_call.1} parent=11 // pred_check_branch
          %222 = sbr.rel (%p220) target = $region28
        $region27: #{tpu_custom_call.1} parent=11 // pred_region
          _
        $region28: #{tpu_custom_call.1} parent=11 // pred_fallthru
          _
        // Predicated region
        $region29: #{tpu_custom_call.1} parent=11 // pred_check
          %p223 = pneg %p149
        $region30: #{tpu_custom_call.1} parent=11 // pred_check_branch
          %225 = sbr.rel (%p223) target = $region32
        $region31: #{tpu_custom_call.1} parent=11 // pred_region
          _
        $region32: #{tpu_custom_call.1} parent=11 // pred_fallthru
          _
        // Predicated region
        $region33: #{tpu_custom_call.1} parent=11 // pred_check
          %p226 = pneg %p170
        $region34: #{tpu_custom_call.1} parent=11 // pred_check_branch
          %228 = sbr.rel (%p226) target = $region36
        $region35: #{tpu_custom_call.1} parent=11 // pred_region
          _
        $region36: #{tpu_custom_call.1} parent=11 // pred_fallthru
          _
      $region12: #{tpu_custom_call.1} parent=5 // pred_fallthru
        _
      %p229 = scmp.lt.s32.totalorder %s18, 3
      // Predicated region
      $region37: #{tpu_custom_call.1} parent=5 // pred_check
        %p230 = pneg %p229
      $region38: #{tpu_custom_call.1} parent=5 // pred_check_branch
        %232 = sbr.rel (%p230) target = $region40
      $region39: #{tpu_custom_call.1} parent=5 // pred_region
        // Predicated region
        $region41: #{tpu_custom_call.1} parent=39 // pred_check
          %p233 = pneg %p38
        $region42: #{tpu_custom_call.1} parent=39 // pred_check_branch
          %235 = sbr.rel (%p233) target = $region44
        $region43: #{tpu_custom_call.1} parent=39 // pred_region
          %p236 = scmp.lt.s32.totalorder %s18, 2
          %s237 = scalar_select %p236, %s18, 2
          %s238 = smul.addr %s237, 8
          %s239 = scalar_lea.vmem %s0, %s238
        $region44: #{tpu_custom_call.1} parent=39 // pred_fallthru
          _
      $region40: #{tpu_custom_call.1} parent=5 // pred_fallthru
        _
      %p240 = scmp.le.s32.totalorder 1, %s18
      %p241 = scmp.lt.s32.totalorder %s18, 4
      %p242 = pnand %p240, %p241
      %p243 = pneg %p242
      // Predicated region
      $region45: #{tpu_custom_call.1} parent=5 // pred_check
        _
      $region46: #{tpu_custom_call.1} parent=5 // pred_check_branch
        %245 = sbr.rel (%p242) target = $region48
      $region47: #{tpu_custom_call.1} parent=5 // pred_region
        %s246 = ssub.s32 %s18, 1
        %p247 = scmp.lt.s32.totalorder %s23, 2
        %s248 = scalar_select %p247, %s23, 2
        %s249 = smul.addr %s248, 8
        %s250 = scalar_lea.vmem %s0, %s249
        %p251 = pneg %p44
        %p252 = pneg %p41
        %p253 = pneg %p65
        %p254 = pneg %p62
        %p255 = pneg %p86
        %p256 = pneg %p83
        %p257 = pneg %p107
        %p258 = pneg %p104
        %p259 = pneg %p128
        %p260 = pneg %p125
        %p261 = pneg %p149
        %p262 = pneg %p146
        %p263 = pneg %p170
        %p264 = pneg %p167
        %p265 = pneg %p196
        %p266 = pneg %p193
        %s267 = sand.u32 %s183, 1
        %s268 = scalar_lea.sflag [#allocation4], %s267
        %s269 = sand.u32 %s183, 1
        %s270 = smul.addr %s269, 4
        %s271 = scalar_lea.vmem [#allocation3], %s270
        %p272 = scmp.lt.s32.totalorder %s23, 2
        %s273 = scalar_select %p272, %s23, 2
        %s274 = smul.addr %s273, 8
        %s275 = scalar_lea.vmem %s0, %s274
        %v276 = vld [vmem:[%s275] sm:$0x7f]
        %v277 = vld [vmem:[%s1] sm:$0xff]
        %v278 = vld [vmem:[%s1 + $0x8] sm:$0xff]
        %v279 = vld [vmem:[%s2] sm:$0xff]
        %v280 = vld [vmem:[%s2 + $0x8] sm:$0xff]
        %282 = vset.pattern.permute.xlu0 0
        %283 = vperm.xlu0 %282, %v279
        %v284 = vpop.permute.xlu0 %283
        %287 = vset.pattern.permute.xlu0 0
        %288 = vperm.xlu0 %287, %v280
        %v289 = vpop.permute.xlu0 %288
        %vm291 = vcmask 56320
        %v293 = vsel %vm291, %v277, 0
        %v296 = vsel %vm291, %v278, 0
        %vm298 = vcmask 1046528
        %v300 = vsel %vm298, %v276, 0
        %302 = vmatprep.subr.mxu0 0.0
        %303 = vmatpush1.msra.mxu0 %v300
        %304 = vmatprep.subr.mxu0 0.0
        %305 = vmatpush1.msra.mxu0 0.0
        %306 = vmatprep.subr.mxu0 0.0
        %307 = vmatpush1.msra.mxu0 0.0
        %308 = vmatprep.subr.mxu0 0.0
        %309 = vmatpush1.msra.mxu0 0.0
        %310 = vmatprep.subr.mxu0 0.0
        %311 = vmatpush1.msra.mxu0 0.0
        %312 = vmatprep.subr.mxu0 0.0
        %313 = vmatpush1.msra.mxu0 0.0
        %314 = vmatprep.subr.mxu0 0.0
        %315 = vmatpush1.msra.mxu0 0.0
        %316 = vmatprep.subr.mxu0 0.0
        %317 = vmatpush1.msra.mxu0 0.0
        %318 = vmatprep.subr.mxu0 0.0
        %319 = vmatpush1.msra.mxu0 0.0
        %320 = vmatprep.subr.mxu0 0.0
        %321 = vmatpush1.msra.mxu0 0.0
        %322 = vmatprep.subr.mxu0 0.0
        %323 = vmatpush1.msra.mxu0 0.0
        %324 = vmatprep.subr.mxu0 0.0
        %325 = vmatpush1.msra.mxu0 0.0
        %326 = vmatprep.subr.mxu0 0.0
        %327 = vmatpush1.msra.mxu0 0.0
        %328 = vmatprep.subr.mxu0 0.0
        %329 = vmatpush1.msra.mxu0 0.0
        %330 = vmatprep.subr.mxu0 0.0
        %331 = vmatpush1.msra.mxu0 0.0
        %332 = vmatprep.subr.mxu0 0.0
        %333 = vmatpush1.msra.mxu0 0.0
        %334 = vmatprep.subr.mxu0 0.0
        %335 = vmatpush1.msra.mxu0 0.0
        %336 = vmatprep.subr.mxu0 0.0
        %337 = vmatpush1.msra.mxu0 0.0
        %338 = vmatprep.subr.mxu0 0.0
        %339 = vmatpush1.msra.mxu0 0.0
        %340 = vmatprep.subr.mxu0 0.0
        %341 = vmatpush1.msra.mxu0 0.0
        %342 = vmatprep.subr.mxu0 0.0
        %343 = vmatpush1.msra.mxu0 0.0
        %344 = vmatprep.subr.mxu0 0.0
        %345 = vmatpush1.msra.mxu0 0.0
        %346 = vmatprep.subr.mxu0 0.0
        %347 = vmatpush1.msra.mxu0 0.0
        %348 = vmatprep.subr.mxu0 0.0
        %349 = vmatpush1.msra.mxu0 0.0
        %350 = vmatprep.subr.mxu0 0.0
        %351 = vmatpush1.msra.mxu0 0.0
        %352 = vmatprep.subr.mxu0 0.0
        %353 = vmatpush1.msra.mxu0 0.0
        %354 = vmatprep.subr.mxu0 0.0
        %355 = vmatpush1.msra.mxu0 0.0
        %356 = vmatprep.subr.mxu0 0.0
        %357 = vmatpush1.msra.mxu0 0.0
        %358 = vmatprep.subr.mxu0 0.0
        %359 = vmatpush1.msra.mxu0 0.0
        %360 = vmatprep.subr.mxu0 0.0
        %361 = vmatpush1.msra.mxu0 0.0
        %362 = vmatprep.subr.mxu0 0.0
        %363 = vmatpush1.msra.mxu0 0.0
        %364 = vmatprep.subr.mxu0 0.0
        %365 = vmatpush1.msra.mxu0 0.0
        %366 = vmatprep.mubr.f32.mxu0 0.0
        %367 = vmatmul.mubr.f32.gmra.mrb[0].mxu0 %v293
        %v368 = vpop.f32.mrb[0].mxu0
        %v369 = vadd.f32 %v284, %v368
        %v370 = vpop.f32.mrb[0].mxu0
        %371 = vmatprep.mubr.f32.mxu0 0.0
        %372 = vmatmul.mubr.f32.gmra.mrb[0].mxu0 %v296
        %v373 = vpop.f32.mrb[0].mxu0
        %v374 = vadd.f32 %v289, %v373
        %v375 = vpop.f32.mrb[0].mxu0
        %376 = vdwg.mxu0
        %v377 = vmax.f32 %v369, 0.0
        %v378 = vmax.f32 %v374, 0.0
        %v379 = vld [vmem:[%s3] sm:$0xff]
        %v380 = vld [vmem:[%s3 + $0x8] sm:$0xff]
        %v381 = vld [vmem:[%s3 + $0x10] sm:$0xff]
        %v382 = vld [vmem:[%s4] sm:$0xff]
        %v383 = vld [vmem:[%s4 + $0x8] sm:$0xff]
        %v384 = vld [vmem:[%s4 + $0x10] sm:$0xff]
        %386 = vset.pattern.permute.xlu0 0
        %387 = vperm.xlu0 %386, %v382
        %v388 = vpop.permute.xlu0 %387
        %391 = vset.pattern.permute.xlu0 0
        %392 = vperm.xlu0 %391, %v383
        %v393 = vpop.permute.xlu0 %392
        %396 = vset.pattern.permute.xlu0 0
        %397 = vperm.xlu0 %396, %v384
        %v398 = vpop.permute.xlu0 %397
        %vm400 = vcmask 130048
        %v402 = vsel %vm400, %v379, 0
        %v405 = vsel %vm400, %v380, 0
        %v408 = vsel %vm400, %v381, 0
        %410 = vmatprep.subr.mxu0 0.0
        %411 = vmatpush1.msra.mxu0 %v377
        %412 = vmatprep.subr.mxu0 0.0
        %413 = vmatpush1.msra.mxu0 %v378
        %414 = vmatprep.subr.mxu0 0.0
        %415 = vmatpush1.msra.mxu0 0.0
        %416 = vmatprep.subr.mxu0 0.0
        %417 = vmatpush1.msra.mxu0 0.0
        %418 = vmatprep.subr.mxu0 0.0
        %419 = vmatpush1.msra.mxu0 0.0
        %420 = vmatprep.subr.mxu0 0.0
        %421 = vmatpush1.msra.mxu0 0.0
        %422 = vmatprep.subr.mxu0 0.0
        %423 = vmatpush1.msra.mxu0 0.0
        %424 = vmatprep.subr.mxu0 0.0
        %425 = vmatpush1.msra.mxu0 0.0
        %426 = vmatprep.subr.mxu0 0.0
        %427 = vmatpush1.msra.mxu0 0.0
        %428 = vmatprep.subr.mxu0 0.0
        %429 = vmatpush1.msra.mxu0 0.0
        %430 = vmatprep.subr.mxu0 0.0
        %431 = vmatpush1.msra.mxu0 0.0
        %432 = vmatprep.subr.mxu0 0.0
        %433 = vmatpush1.msra.mxu0 0.0
        %434 = vmatprep.subr.mxu0 0.0
        %435 = vmatpush1.msra.mxu0 0.0
        %436 = vmatprep.subr.mxu0 0.0
        %437 = vmatpush1.msra.mxu0 0.0
        %438 = vmatprep.subr.mxu0 0.0
        %439 = vmatpush1.msra.mxu0 0.0
        %440 = vmatprep.subr.mxu0 0.0
        %441 = vmatpush1.msra.mxu0 0.0
        %442 = vmatprep.subr.mxu0 0.0
        %443 = vmatpush1.msra.mxu0 0.0
        %444 = vmatprep.subr.mxu0 0.0
        %445 = vmatpush1.msra.mxu0 0.0
        %446 = vmatprep.subr.mxu0 0.0
        %447 = vmatpush1.msra.mxu0 0.0
        %448 = vmatprep.subr.mxu0 0.0
        %449 = vmatpush1.msra.mxu0 0.0
        %450 = vmatprep.subr.mxu0 0.0
        %451 = vmatpush1.msra.mxu0 0.0
        %452 = vmatprep.subr.mxu0 0.0
        %453 = vmatpush1.msra.mxu0 0.0
        %454 = vmatprep.subr.mxu0 0.0
        %455 = vmatpush1.msra.mxu0 0.0
        %456 = vmatprep.subr.mxu0 0.0
        %457 = vmatpush1.msra.mxu0 0.0
        %458 = vmatprep.subr.mxu0 0.0
        %459 = vmatpush1.msra.mxu0 0.0
        %460 = vmatprep.subr.mxu0 0.0
        %461 = vmatpush1.msra.mxu0 0.0
        %462 = vmatprep.subr.mxu0 0.0
        %463 = vmatpush1.msra.mxu0 0.0
        %464 = vmatprep.subr.mxu0 0.0
        %465 = vmatpush1.msra.mxu0 0.0
        %466 = vmatprep.subr.mxu0 0.0
        %467 = vmatpush1.msra.mxu0 0.0
        %468 = vmatprep.subr.mxu0 0.0
        %469 = vmatpush1.msra.mxu0 0.0
        %470 = vmatprep.subr.mxu0 0.0
        %471 = vmatpush1.msra.mxu0 0.0
        %472 = vmatprep.subr.mxu0 0.0
        %473 = vmatpush1.msra.mxu0 0.0
        %474 = vmatprep.mubr.f32.mxu0 0.0
        %475 = vmatmul.mubr.f32.gmra.mrb[0].mxu0 %v402
        %v476 = vpop.f32.mrb[0].mxu0
        %v477 = vadd.f32 %v388, %v476
        %v478 = vpop.f32.mrb[0].mxu0
        %479 = vmatprep.mubr.f32.mxu0 0.0
        %480 = vmatmul.mubr.f32.gmra.mrb[0].mxu0 %v405
        %v481 = vpop.f32.mrb[0].mxu0
        %v482 = vadd.f32 %v393, %v481
        %v483 = vpop.f32.mrb[0].mxu0
        %484 = vmatprep.mubr.f32.mxu0 0.0
        %485 = vmatmul.mubr.f32.gmra.mrb[0].mxu0 %v408
        %v486 = vpop.f32.mrb[0].mxu0
        %v487 = vadd.f32 %v398, %v486
        %v488 = vpop.f32.mrb[0].mxu0
        %489 = vdwg.mxu0
        %v490 = vmax.f32 %v482, 0.0
        %v491 = vmax.f32 %v487, 0.0
        %v492 = vld [vmem:[%s5] sm:$0xff]
        %v493 = vld [vmem:[%s5 + $0x8] sm:$0xff]
        %495 = vset.pattern.permute.xlu0 0
        %496 = vperm.xlu0 %495, %v492
        %v497 = vpop.permute.xlu0 %496
        %500 = vset.pattern.permute.xlu0 0
        %501 = vperm.xlu0 %500, %v493
        %v502 = vpop.permute.xlu0 %501
        %v504 = vmul.f32 %v490, %v497
        %v505 = vmul.f32 %v491, %v502
        %v506 = vadd.f32 %v504, %v505
        %v507 = vrot.slane %v506, 4
        %v508 = vadd.f32 %v506, %v507
        %v509 = vrot.slane %v508, 2
        %v510 = vadd.f32 %v508, %v509
        %v511 = vrot.slane %v510, 1
        %v512 = vadd.f32 %v510, %v511
        %v513 = vld [vmem:[#allocation2] sm:$0x1]
        %515 = vset.pattern.permute.xlu0 0
        %516 = vperm.xlu0 %515, %v513
        %v517 = vpop.permute.xlu0 %516
        %v519 = vlaneseq
        %v520 = vshrl.u32 %v519, 7
        %v521 = vsub.s32 0, %v520
        %v522 = vrot.slane %v517, %v521
        %v523 = vadd.f32 %v512, %v522
        %524 = vst [vmem:[%s271] sm:$0x7] %v477
        %525 = vst [vmem:[%s271 + $0x3] sm:$0x1] %v523
        %s526 = sand.u32 %s183, 1
        %s527 = scalar_lea.sflag [#allocation4], %s526
        %s528 = sand.u32 %s183, 1
        %s529 = smul.addr %s528, 4
        %s530 = scalar_lea.vmem [#allocation3], %s529
        // Predicated region
        $region49: #{tpu_custom_call.1} parent=47 // pred_check
          %p531 = pneg %p193
        $region50: #{tpu_custom_call.1} parent=47 // pred_check_branch
          %533 = sbr.rel (%p531) target = $region52
        $region51: #{tpu_custom_call.1} parent=47 // pred_region
          %s535 = ssub.s32 64, 64
          %536 = vsyncadd %s527, %s535
          %s537 = smul.addr %s23, 64
          %s538 = scalar_lea.hbm %s7, %s537
          %s540 = sshll.u32 %s530, 4
          %s541 = int_to_ptr.vmem [resolvable:$true] %s540
          %543 = dma.vmem_to_hbm [thread:$0]  %s541, 64, %s538, %s527
        $region52: #{tpu_custom_call.1} parent=47 // pred_fallthru
          _
      $region48: #{tpu_custom_call.1} parent=5 // pred_fallthru
        _
      %p544 = scmp.le.s32.totalorder 2, %s18
      // Predicated region
      $region53: #{tpu_custom_call.1} parent=5 // pred_check
        %p545 = pneg %p544
      $region54: #{tpu_custom_call.1} parent=5 // pred_check_branch
        %547 = sbr.rel (%p545) target = $region56
      $region55: #{tpu_custom_call.1} parent=5 // pred_region
        %s548 = ssub.s32 %s18, 2
        // Predicated region
        $region57: #{tpu_custom_call.1} parent=55 // pred_check
          %p549 = pneg %p199
        $region58: #{tpu_custom_call.1} parent=55 // pred_check_branch
          %551 = sbr.rel (%p549) target = $region60
        $region59: #{tpu_custom_call.1} parent=55 // pred_region
          %s552 = sand.u32 %s184, 1
          %s553 = scalar_lea.sflag [#allocation4], %s552
          %s554 = sand.u32 %s184, 1
          %s555 = smul.addr %s554, 4
          %s556 = scalar_lea.vmem [#allocation3], %s555
          %557 = dma.done %s553, 64
        $region60: #{tpu_custom_call.1} parent=55 // pred_fallthru
          _
      $region56: #{tpu_custom_call.1} parent=5 // pred_fallthru
        _
    $region6: #{tpu_custom_call.1} parent=1 // loop_footer
      %s22 = sadd.s32 1, %s18
    $region7: #{tpu_custom_call.1} parent=1 // loop_footer_branch
      %17 = sbr.rel target = $region3
    $region8: #{tpu_custom_call.1} parent=1 // loop_exit
      _
    %558 = vsyncpa [#allocation4], 1
    %s559 = scalar_lea.sflag [#allocation4], 1
    %560 = vsyncpa %s559, 1

</llo_original>
